<compile_context>
chip_gen: v7x
topology: tpu7x:2x2x1
jax: 0.10.0
libtpu: 0.0.40
codegen_flags: <defaults>
</compile_context>

<pallas_src>
import math
from functools import partial

import jax
import jax.numpy as jnp
from jax.experimental import pallas as pl
from jax.experimental.pallas import tpu as pltpu


# ---------------------------------------------------------------------------
# Kernel 1: conditioning MLP (Linear -> SiLU -> Linear), tiled over the 4H
# reduction dim.  Emits (scale + 1) and shift, already in hiddens.dtype and
# lane-folded to Hk = H * k_fold.
# ---------------------------------------------------------------------------
def _film_mlp_kernel(cond_ref, w1_ref, b1_ref, w2_ref, b2_ref,
                     scale_p1_ref, shift_ref, acc_ref,
                     *, H, k_fold, total_4h, tile_k):
    kk = pl.program_id(0)

    @pl.when(kk == 0)
    def _():
        acc_ref[...] = jnp.zeros_like(acc_ref)

    w1_blk = w1_ref[...]
    b1_blk = b1_ref[...].astype(jnp.float32)
    w2_blk = w2_ref[...]
    if total_4h % tile_k != 0:
        # Ragged last reduction tile: zero the padded columns of w1/b1 and the
        # padded rows of w2 so the pad region contributes nothing.
        col = jax.lax.broadcasted_iota(jnp.int32, (1, tile_k), 1) + kk * tile_k
        row = jax.lax.broadcasted_iota(jnp.int32, (tile_k, 1), 0) + kk * tile_k
        w1_blk = jnp.where(col < total_4h, w1_blk, 0)
        b1_blk = jnp.where(col < total_4h, b1_blk, 0)
        w2_blk = jnp.where(row < total_4h, w2_blk, 0)

    h1 = jnp.dot(cond_ref[...], w1_blk, preferred_element_type=jnp.float32)
    h1 = h1 + b1_blk
    h1 = h1 * (1.0 / (1.0 + jnp.exp(-h1)))                       # SiLU (EUP)
    acc_ref[...] += jnp.dot(h1.astype(w2_blk.dtype), w2_blk,
                            preferred_element_type=jnp.float32)

    @pl.when(kk == pl.num_programs(0) - 1)
    def _():
        y = acc_ref[...] + b2_ref[...].astype(jnp.float32)       # (B, 2H)
        scale_p1 = y[:, :H] + 1.0                                # fold the "+1"
        shift = y[:, H:]
        if k_fold > 1:                                           # lane-fold
            scale_p1 = jnp.concatenate([scale_p1] * k_fold, axis=-1)
            shift = jnp.concatenate([shift] * k_fold, axis=-1)
        scale_p1_ref[...] = scale_p1.astype(scale_p1_ref.dtype)
        shift_ref[...] = shift.astype(shift_ref.dtype)


# ---------------------------------------------------------------------------
# Kernel 2: FiLM modulation — one FMA per element, HBM-bandwidth bound.
# ---------------------------------------------------------------------------
def _film_mod_kernel(scale_ref, shift_ref, hid_ref, out_ref):
    # scale/shift blocks are (1, 1, Hk); hid/out blocks are (1, TN, Hk).
    out_ref[...] = (hid_ref[...] * scale_ref[...]
                    + shift_ref[...]).astype(out_ref.dtype)


def _pick_row_tile(n_rows, lane_dim, itemsize, target_bytes=4 << 20):
    """Row tile for the modulation kernel: byte-capped (~4 MiB), dtype-aware
    sublane granularity (8 f32 / 16 bf16 / 32 int8).  No divisibility
    requirement — the cdiv grid handles a ragged last block."""
    sub = max(8, 32 // itemsize)
    max_rows = max(1, target_bytes // max(1, lane_dim * itemsize))
    if n_rows <= max_rows:
        return n_rows                    # full dim is always a legal block
    return max(sub, (max_rows // sub) * sub)


def _pick_mlp_k_tile(D, four_h, two_h, itemsize, target_bytes=2 << 20):
    """Reduction tile over the 4H dim of the MLP so the per-step weight blocks
    w1 (D, TK) and w2 (TK, 2H) each stay ~<= 2 MiB."""
    max_tk = min(target_bytes // max(1, D * itemsize),
                 target_bytes // max(1, two_h * itemsize))
    if four_h <= max(128, max_tk):
        return four_h                    # single step, full reduction dim
    return max(128, (max_tk // 128) * 128)


def film_forward(conditions, hiddens, w1, b1, w2, b2):
    """conditions: (B, D); hiddens: (B, N, H); w1: (D, 4H); b1: (4H,);
    w2: (4H, 2H); b2: (2H,).  Returns (B, N, H)."""
    B, N, H = hiddens.shape
    D = conditions.shape[-1]
    assert w1.shape == (D, 4 * H) and w2.shape == (4 * H, 2 * H)

    out_dtype = hiddens.dtype
    itemsize = jnp.dtype(out_dtype).itemsize

    # ---- lane-dense layout: fold k sequence positions into the lane dim ----
    if H % 128 == 0:
        k = 1
    else:
        k = 128 // math.gcd(H, 128)
        if N % k != 0:
            k = 1              # ragged fallback: masked stores, still correct
    Nk, Hk = N // k, H * k

    # ---- 1) conditioning MLP (one-shot, off the per-tile critical path) ----
    TK = _pick_mlp_k_tile(D, 4 * H, 2 * H, jnp.dtype(w1.dtype).itemsize)
    nk = pl.cdiv(4 * H, TK)
    mlp_flops = 2 * B * D * 4 * H + 2 * B * 4 * H * 2 * H + 6 * B * H
    mlp_bytes = (conditions.size * conditions.dtype.itemsize
                 + w1.size * w1.dtype.itemsize
                 + w2.size * w2.dtype.itemsize
                 + (b1.size + b2.size) * b1.dtype.itemsize
                 + 2 * B * Hk * itemsize)
    scale_p1, shift = pl.pallas_call(
        partial(_film_mlp_kernel, H=H, k_fold=k, total_4h=4 * H, tile_k=TK),
        out_shape=(jax.ShapeDtypeStruct((B, Hk), out_dtype),
                   jax.ShapeDtypeStruct((B, Hk), out_dtype)),
        grid=(nk,),
        in_specs=[
            pl.BlockSpec((B, D), lambda kk: (0, 0)),
            pl.BlockSpec((D, TK), lambda kk: (0, kk)),
            pl.BlockSpec((1, TK), lambda kk: (0, kk)),
            pl.BlockSpec((TK, 2 * H), lambda kk: (kk, 0)),
            pl.BlockSpec((1, 2 * H), lambda kk: (0, 0)),
        ],
        out_specs=(pl.BlockSpec((B, Hk), lambda kk: (0, 0)),
                   pl.BlockSpec((B, Hk), lambda kk: (0, 0))),
        scratch_shapes=[pltpu.VMEM((B, 2 * H), jnp.float32)],
        compiler_params=pltpu.CompilerParams(
            dimension_semantics=("arbitrary",),
            vmem_limit_bytes=32 * 1024 * 1024),
        cost_estimate=pl.CostEstimate(
            flops=mlp_flops, transcendentals=B * 4 * H,
            bytes_accessed=mlp_bytes),
    )(conditions, w1, b1.reshape(1, -1), w2, b2.reshape(1, -1))

    # Unit-dim reshapes are free metadata ops (no HBM round trip).
    scale3 = scale_p1.reshape(B, 1, Hk)
    shift3 = shift.reshape(B, 1, Hk)
    hid2 = hiddens.reshape(B, Nk, Hk)

    # ---- 2) FiLM modulation: streaming FMA over ~4 MiB blocks --------------
    TN = _pick_row_tile(Nk, Hk, itemsize)
    nt = pl.cdiv(Nk, TN)
    grid = (B * nt,)                       # single parallel axis (v7x 2-TC)
    mod_bytes = 2 * B * N * H * itemsize + 2 * B * Hk * itemsize
    # TODO(synk): if the producer/consumer of `hiddens` is also a Pallas
    # kernel, apply this FMA as its epilogue instead — deletes one full HBM
    # round trip (~2x on this op), which no tiling tweak here can match.
    out2 = pl.pallas_call(
        _film_mod_kernel,
        out_shape=jax.ShapeDtypeStruct((B, Nk, Hk), out_dtype),
        grid=grid,
        in_specs=[
            pl.BlockSpec((1, 1, Hk), lambda i: (i // nt, 0, 0)),      # scale+1
            pl.BlockSpec((1, 1, Hk), lambda i: (i // nt, 0, 0)),      # shift
            pl.BlockSpec((1, TN, Hk), lambda i: (i // nt, i % nt, 0)),
        ],
        out_specs=pl.BlockSpec((1, TN, Hk), lambda i: (i // nt, i % nt, 0)),
        compiler_params=pltpu.CompilerParams(
            dimension_semantics=("parallel",),
            vmem_limit_bytes=32 * 1024 * 1024),
        cost_estimate=pl.CostEstimate(
            flops=2 * B * N * H, transcendentals=0,
            bytes_accessed=mod_bytes),
    )(scale3, shift3, hid2)
    return out2.reshape(B, N, H)


def film_reference(conditions, hiddens, w1, b1, w2, b2):
    h1 = jax.nn.silu(conditions @ w1 + b1)
    y = h1 @ w2 + b2
    H = hiddens.shape[-1]
    scale, shift = y[:, :H], y[:, H:]
    return hiddens * (scale[:, None, :] + 1.0) + shift[:, None, :]


if __name__ == "__main__":
    B, N = 2, 8          # batch, sequence length
    D = 32               # conditioning dim (FiLM "dim")
    H = 32               # hidden_dim

    key = jax.random.PRNGKey(0)
    k_cond, k_hid, k_w1, k_b1 = jax.random.split(key, 4)

    conditions = jax.random.normal(k_cond, (B, D), dtype=jnp.float32)
    hiddens = jax.random.normal(k_hid, (B, N, H), dtype=jnp.float32)

    # Parameters: first Linear uniform init; last Linear zeros, exactly as in
    # FiLM.__init__ (nn.init.zeros_ on weight and bias).
    bound1 = 1.0 / jnp.sqrt(D)
    w1 = jax.random.uniform(k_w1, (D, 4 * H), jnp.float32, -bound1, bound1)
    b1 = jax.random.uniform(k_b1, (4 * H,), jnp.float32, -bound1, bound1)
    w2 = jnp.zeros((4 * H, 2 * H), jnp.float32)
    b2 = jnp.zeros((2 * H,), jnp.float32)

    out = jax.block_until_ready(film_forward(conditions, hiddens, w1, b1, w2, b2))
    ref = film_reference(conditions, hiddens, w1, b1, w2, b2)
    assert out.shape == (B, N, H)
    assert jnp.allclose(out, ref, atol=1e-5, rtol=1e-5)

    # Exercise the full MLP path with non-zero second-layer weights too.
    k_w2, k_b2 = jax.random.split(jax.random.PRNGKey(1))
    w2b = 0.02 * jax.random.normal(k_w2, (4 * H, 2 * H), jnp.float32)
    b2b = 0.02 * jax.random.normal(k_b2, (2 * H,), jnp.float32)
    out2 = jax.block_until_ready(film_forward(conditions, hiddens, w1, b1, w2b, b2b))
    ref2 = film_reference(conditions, hiddens, w1, b1, w2b, b2b)
    assert jnp.allclose(out2, ref2, atol=1e-5, rtol=1e-5)

    print("KERNEL_OK")
</pallas_src>

<mosaic_0001>
module attributes {stable_mosaic.version = 11 : i64} {
  func.func @_film_mlp_kernel(%arg0: i32, %arg1: memref<2x32xf32, #tpu.memory_space<vmem>>, %arg2: memref<32x128xf32, #tpu.memory_space<vmem>>, %arg3: memref<1x128xf32, #tpu.memory_space<vmem>>, %arg4: memref<128x64xf32, #tpu.memory_space<vmem>>, %arg5: memref<1x64xf32, #tpu.memory_space<vmem>>, %arg6: memref<2x128xf32, #tpu.memory_space<vmem>>, %arg7: memref<2x128xf32, #tpu.memory_space<vmem>>, %arg8: memref<2x64xf32, #tpu.memory_space<vmem>>) attributes {dimension_semantics = [#tpu.dimension_semantics<arbitrary>], iteration_bounds = array<i64: 1>, scalar_prefetch = 0 : i64, scratch_operands = 1 : i64, tpu.core_type = #tpu.core_type<tc>, window_params = [{pipeline_mode = #tpu.pipeline_mode<synchronous>, transform_indices = @transform_0, window_bounds = array<i64: 2, 32>}, {transform_indices = @transform_1, window_bounds = array<i64: 32, 128>}, {transform_indices = @transform_2, window_bounds = array<i64: 1, 128>}, {transform_indices = @transform_3, window_bounds = array<i64: 128, 64>}, {pipeline_mode = #tpu.pipeline_mode<synchronous>, transform_indices = @transform_4, window_bounds = array<i64: 1, 64>}, {pipeline_mode = #tpu.pipeline_mode<synchronous>, transform_indices = @transform_5, window_bounds = array<i64: 2, 128>}, {pipeline_mode = #tpu.pipeline_mode<synchronous>, transform_indices = @transform_6, window_bounds = array<i64: 2, 128>}]} {
    %c0_i32 = arith.constant 0 : i32
    %0 = arith.cmpi eq, %arg0, %c0_i32 : i32
    %1 = arith.extui %0 : i1 to i32
    %c0_i32_0 = arith.constant 0 : i32
    %2 = arith.cmpi ne, %1, %c0_i32_0 : i32
    scf.if %2 {
      %cst_18 = arith.constant 0.000000e+00 : f32
      %25 = vector.broadcast %cst_18 : f32 to vector<2x64xf32>
      %c0_19 = arith.constant 0 : index
      %c0_20 = arith.constant 0 : index
      %26 = vector.load %arg8[%c0_19, %c0_20] : memref<2x64xf32, #tpu.memory_space<vmem>>, vector<2x64xf32>
      tpu.vector_store %arg8[%c0_19, %c0_20], %25 {strides = array<i32>} : memref<2x64xf32, #tpu.memory_space<vmem>>, vector<2x64xf32>,
    } else {
    }
    %c0 = arith.constant 0 : index
    %c0_1 = arith.constant 0 : index
    %3 = vector.load %arg2[%c0, %c0_1] : memref<32x128xf32, #tpu.memory_space<vmem>>, vector<32x128xf32>
    %c0_2 = arith.constant 0 : index
    %c0_3 = arith.constant 0 : index
    %4 = vector.load %arg3[%c0_2, %c0_3] : memref<1x128xf32, #tpu.memory_space<vmem>>, vector<1x128xf32>
    %c0_4 = arith.constant 0 : index
    %c0_5 = arith.constant 0 : index
    %5 = vector.load %arg4[%c0_4, %c0_5] : memref<128x64xf32, #tpu.memory_space<vmem>>, vector<128x64xf32>
    %c0_6 = arith.constant 0 : index
    %c0_7 = arith.constant 0 : index
    %6 = vector.load %arg1[%c0_6, %c0_7] : memref<2x32xf32, #tpu.memory_space<vmem>>, vector<2x32xf32>
    %cst = arith.constant dense<0.000000e+00> : vector<2x128xf32>
    %7 = tpu.matmul %6, %3, %cst {dimension_numbers = #tpu.dot_dimension_numbers<[1], [0], [0], [1], [0, 0, 1, 1], [], []>} : vector<2x32xf32>, vector<32x128xf32>, vector<2x128xf32> -> vector<2x128xf32>
    %8 = vector.broadcast %4 : vector<1x128xf32> to vector<2x128xf32>
    %9 = arith.addf %7, %8 : vector<2x128xf32>
    %cst_8 = arith.constant 0.000000e+00 : f32
    %10 = vector.broadcast %cst_8 : f32 to vector<2x128xf32>
    %11 = arith.subf %10, %9 : vector<2x128xf32>
    %12 = math.exp %11 : vector<2x128xf32>
    %cst_9 = arith.constant 1.000000e+00 : f32
    %13 = vector.broadcast %cst_9 : f32 to vector<2x128xf32>
    %14 = arith.addf %13, %12 : vector<2x128xf32>
    %cst_10 = arith.constant 1.000000e+00 : f32
    %15 = vector.broadcast %cst_10 : f32 to vector<2x128xf32>
    %16 = arith.divf %15, %14 : vector<2x128xf32>
    %17 = arith.mulf %9, %16 : vector<2x128xf32>
    %c0_11 = arith.constant 0 : index
    %c0_12 = arith.constant 0 : index
    %18 = vector.load %arg8[%c0_11, %c0_12] : memref<2x64xf32, #tpu.memory_space<vmem>>, vector<2x64xf32>
    %cst_13 = arith.constant dense<0.000000e+00> : vector<2x64xf32>
    %19 = tpu.matmul %17, %5, %cst_13 {dimension_numbers = #tpu.dot_dimension_numbers<[1], [0], [0], [1], [0, 0, 1, 1], [], []>} : vector<2x128xf32>, vector<128x64xf32>, vector<2x64xf32> -> vector<2x64xf32>
    %20 = arith.addf %18, %19 : vector<2x64xf32>
    %c0_14 = arith.constant 0 : index
    %c0_15 = arith.constant 0 : index
    %21 = vector.load %arg8[%c0_14, %c0_15] : memref<2x64xf32, #tpu.memory_space<vmem>>, vector<2x64xf32>
    tpu.vector_store %arg8[%c0_14, %c0_15], %20 {strides = array<i32>} : memref<2x64xf32, #tpu.memory_space<vmem>>, vector<2x64xf32>,
    %c0_i32_16 = arith.constant 0 : i32
    %22 = arith.cmpi eq, %arg0, %c0_i32_16 : i32
    %23 = arith.extui %22 : i1 to i32
    %c0_i32_17 = arith.constant 0 : i32
    %24 = arith.cmpi ne, %23, %c0_i32_17 : i32
    scf.if %24 {
      %c0_18 = arith.constant 0 : index
      %c0_19 = arith.constant 0 : index
      %25 = vector.load %arg8[%c0_18, %c0_19] : memref<2x64xf32, #tpu.memory_space<vmem>>, vector<2x64xf32>
      %c0_20 = arith.constant 0 : index
      %c0_21 = arith.constant 0 : index
      %26 = vector.load %arg5[%c0_20, %c0_21] : memref<1x64xf32, #tpu.memory_space<vmem>>, vector<1x64xf32>
      %27 = vector.broadcast %26 : vector<1x64xf32> to vector<2x64xf32>
      %28 = arith.addf %25, %27 : vector<2x64xf32>
      %29 = vector.extract_strided_slice %28 {offsets = [0, 0], sizes = [2, 32], strides = [1, 1]} : vector<2x64xf32> to vector<2x32xf32>
      %cst_22 = arith.constant 1.000000e+00 : f32
      %30 = vector.broadcast %cst_22 : f32 to vector<2x32xf32>
      %31 = arith.addf %29, %30 : vector<2x32xf32>
      %32 = vector.extract_strided_slice %28 {offsets = [0, 32], sizes = [2, 32], strides = [1, 1]} : vector<2x64xf32> to vector<2x32xf32>
      %33 = tpu.concatenate %31, %31, %31, %31 in 1 : vector<2x32xf32>, vector<2x32xf32>, vector<2x32xf32>, vector<2x32xf32> -> vector<2x128xf32>
      %34 = tpu.concatenate %32, %32, %32, %32 in 1 : vector<2x32xf32>, vector<2x32xf32>, vector<2x32xf32>, vector<2x32xf32> -> vector<2x128xf32>
      %c0_23 = arith.constant 0 : index
      %c0_24 = arith.constant 0 : index
      %35 = vector.load %arg6[%c0_23, %c0_24] : memref<2x128xf32, #tpu.memory_space<vmem>>, vector<2x128xf32>
      tpu.vector_store %arg6[%c0_23, %c0_24], %33 {strides = array<i32>} : memref<2x128xf32, #tpu.memory_space<vmem>>, vector<2x128xf32>,
      %c0_25 = arith.constant 0 : index
      %c0_26 = arith.constant 0 : index
      %36 = vector.load %arg7[%c0_25, %c0_26] : memref<2x128xf32, #tpu.memory_space<vmem>>, vector<2x128xf32>
      tpu.vector_store %arg7[%c0_25, %c0_26], %34 {strides = array<i32>} : memref<2x128xf32, #tpu.memory_space<vmem>>, vector<2x128xf32>,
    } else {
    }
    return
  }
  func.func @transform_0(%arg0: i32) -> (i32, i32) {
    %c0_i32 = arith.constant 0 : i32
    %c0_i32_0 = arith.constant 0 : i32
    %c0_i32_1 = arith.constant 0 : i32
    return %c0_i32, %c0_i32_0 : i32, i32
  }
  func.func @transform_1(%arg0: i32) -> (i32, i32) {
    %c0_i32 = arith.constant 0 : i32
    %c0_i32_0 = arith.constant 0 : i32
    return %c0_i32, %arg0 : i32, i32
  }
  func.func @transform_2(%arg0: i32) -> (i32, i32) {
    %c0_i32 = arith.constant 0 : i32
    %c0_i32_0 = arith.constant 0 : i32
    return %c0_i32, %arg0 : i32, i32
  }
  func.func @transform_3(%arg0: i32) -> (i32, i32) {
    %c0_i32 = arith.constant 0 : i32
    %c0_i32_0 = arith.constant 0 : i32
    return %arg0, %c0_i32 : i32, i32
  }
  func.func @transform_4(%arg0: i32) -> (i32, i32) {
    %c0_i32 = arith.constant 0 : i32
    %c0_i32_0 = arith.constant 0 : i32
    %c0_i32_1 = arith.constant 0 : i32
    return %c0_i32, %c0_i32_0 : i32, i32
  }
  func.func @transform_5(%arg0: i32) -> (i32, i32) {
    %c0_i32 = arith.constant 0 : i32
    %c0_i32_0 = arith.constant 0 : i32
    %c0_i32_1 = arith.constant 0 : i32
    return %c0_i32, %c0_i32_0 : i32, i32
  }
  func.func @transform_6(%arg0: i32) -> (i32, i32) {
    %c0_i32 = arith.constant 0 : i32
    %c0_i32_0 = arith.constant 0 : i32
    %c0_i32_1 = arith.constant 0 : i32
    return %c0_i32, %c0_i32_0 : i32, i32
  }
}

</mosaic_0001>

<llo_original>
// kernel: tpu_custom_call.1
$region0: #{tpu_custom_call.1}
  #allocation0 [shape = 'u32[]', space=smem, size = 0x4, offset = 0x4, fixed_abs, tag = 'smem constant byte address 0x4 - core index']
  #allocation1 [shape = 'u32[144,128]{1,0:T(1,128)}', space=vmem, size = 0x12000, scoped, tag = 'internal scratch']
  #allocation2 [shape = 'f32[2,64]{1,0:T(2,128)}', space=vmem, size = 0x400, scoped, tag = 'scratch operand']
  %s0 = inlined_call_operand.vmem [shape: f32[2,32], index: 0, kind: input, shape index: {}]
  %s1 = inlined_call_operand.vmem [shape: f32[32,128], index: 1, kind: input, shape index: {}]
  %s2 = inlined_call_operand.vmem [shape: f32[1,128], index: 2, kind: input, shape index: {}]
  %s3 = inlined_call_operand.vmem [shape: f32[128,64], index: 3, kind: input, shape index: {}]
  %s4 = inlined_call_operand.vmem [shape: f32[1,64], index: 4, kind: input, shape index: {}]
  %s5 = inlined_call_operand.hbm [shape: f32[2,128], index: 5, kind: output, shape index: {0}]
  %s6 = inlined_call_operand.hbm [shape: f32[2,128], index: 6, kind: output, shape index: {1}]
  %7 = xla_tuple %s5, %s6
  %s8 = sld [smem:[#allocation0]]
  $region46: #{tpu_custom_call.1} parent=0
    _
  %s10 = ssub.s32 1, %s8
  %s11 = scalar_select 0, %s10, %s8
  $region1: #{tpu_custom_call.1} parent=0
    #allocation3 [shape = 'u8[1024]{0}', space=vmem, size = 0x400, scoped, tag = 'output window, operand 0, single buffered']
    #allocation4 [shape = 's32[1]{0}', space=sflag, size = 0x4, scoped, tag = 'scoped memory for tpu_custom_call.1']
    #allocation5 [shape = 'u8[1024]{0}', space=vmem, size = 0x400, scoped, tag = 'output window, operand 1, single buffered']
    #allocation6 [shape = 's32[1]{0}', space=sflag, size = 0x4, scoped, tag = 'scoped memory for tpu_custom_call.1']
    %12 = vsyncpa [#allocation4], 0
    %13 = vsyncpa [#allocation6], 0
    // Predicated region
    $region2: #{tpu_custom_call.1} parent=1 // pred_check
      _
    $region3: #{tpu_custom_call.1} parent=1 // pred_check_branch
      %15 = sbr.rel (0) target = $region5
    $region4: #{tpu_custom_call.1} parent=1 // pred_region
      _
    $region5: #{tpu_custom_call.1} parent=1 // pred_fallthru
      _
    // Predicated region
    $region6: #{tpu_custom_call.1} parent=1 // pred_check
      _
    $region7: #{tpu_custom_call.1} parent=1 // pred_check_branch
      %17 = sbr.rel (0) target = $region9
    $region8: #{tpu_custom_call.1} parent=1 // pred_region
      _
    $region9: #{tpu_custom_call.1} parent=1 // pred_fallthru
      _
    // Predicated region
    $region10: #{tpu_custom_call.1} parent=1 // pred_check
      _
    $region11: #{tpu_custom_call.1} parent=1 // pred_check_branch
      %19 = sbr.rel (0) target = $region13
    $region12: #{tpu_custom_call.1} parent=1 // pred_region
      _
    $region13: #{tpu_custom_call.1} parent=1 // pred_fallthru
      _
    // Predicated region
    $region14: #{tpu_custom_call.1} parent=1 // pred_check
      _
    $region15: #{tpu_custom_call.1} parent=1 // pred_check_branch
      %21 = sbr.rel (0) target = $region17
    $region16: #{tpu_custom_call.1} parent=1 // pred_region
      _
    $region17: #{tpu_custom_call.1} parent=1 // pred_fallthru
      _
    // Predicated region
    $region18: #{tpu_custom_call.1} parent=1 // pred_check
      _
    $region19: #{tpu_custom_call.1} parent=1 // pred_check_branch
      %23 = sbr.rel (0) target = $region21
    $region20: #{tpu_custom_call.1} parent=1 // pred_region
      _
    $region21: #{tpu_custom_call.1} parent=1 // pred_fallthru
      _
    %p24 = scmp.eq.s32.totalorder 0, 0
    // Predicated region
    $region22: #{tpu_custom_call.1} parent=1 // pred_check
      %p25 = pneg %p24
    $region23: #{tpu_custom_call.1} parent=1 // pred_check_branch
      %27 = sbr.rel (%p25) target = $region25
    $region24: #{tpu_custom_call.1} parent=1 // pred_region
      %vm28 = vcmask 517120
      %29 = vst.msk [vmem:[#allocation2] sm:$0x3] %vm28, 0.0
    $region25: #{tpu_custom_call.1} parent=1 // pred_fallthru
      _
    %v30 = vld [vmem:[%s1] sm:$0xff]
    %v31 = vld [vmem:[%s1 + $0x8] sm:$0xff]
    %v32 = vld [vmem:[%s1 + $0x10] sm:$0xff]
    %v33 = vld [vmem:[%s1 + $0x18] sm:$0xff]
    %v34 = vld [vmem:[%s2] sm:$0x1]
    %v35 = vld [vmem:[%s3] sm:$0xff]
    %v36 = vld [vmem:[%s3 + $0x8] sm:$0xff]
    %v37 = vld [vmem:[%s3 + $0x10] sm:$0xff]
    %v38 = vld [vmem:[%s3 + $0x18] sm:$0xff]
    %v39 = vld [vmem:[%s3 + $0x20] sm:$0xff]
    %v40 = vld [vmem:[%s3 + $0x28] sm:$0xff]
    %v41 = vld [vmem:[%s3 + $0x30] sm:$0xff]
    %v42 = vld [vmem:[%s3 + $0x38] sm:$0xff]
    %v43 = vld [vmem:[%s3 + $0x40] sm:$0xff]
    %v44 = vld [vmem:[%s3 + $0x48] sm:$0xff]
    %v45 = vld [vmem:[%s3 + $0x50] sm:$0xff]
    %v46 = vld [vmem:[%s3 + $0x58] sm:$0xff]
    %v47 = vld [vmem:[%s3 + $0x60] sm:$0xff]
    %v48 = vld [vmem:[%s3 + $0x68] sm:$0xff]
    %v49 = vld [vmem:[%s3 + $0x70] sm:$0xff]
    %v50 = vld [vmem:[%s3 + $0x78] sm:$0xff]
    %v51 = vld [vmem:[%s0] sm:$0x3]
    %v53 = vlaneseq
    %v54 = vshrl.u32 %v53, 7
    %v55 = vsub.s32 0, %v54
    %v56 = vrot.slane %v34, %v55
    %vm58 = vcmask 261120
    %v60 = vsel %vm58, %v51, 0
    %62 = vmatprep.subr.mxu0 0.0
    %63 = vmatpush1.msra.mxu0 %v30
    %64 = vmatprep.subr.mxu0 0.0
    %65 = vmatpush1.msra.mxu0 %v31
    %66 = vmatprep.subr.mxu0 0.0
    %67 = vmatpush1.msra.mxu0 %v32
    %68 = vmatprep.subr.mxu0 0.0
    %69 = vmatpush1.msra.mxu0 %v33
    %70 = vmatprep.subr.mxu0 0.0
    %71 = vmatpush1.msra.mxu0 0.0
    %72 = vmatprep.subr.mxu0 0.0
    %73 = vmatpush1.msra.mxu0 0.0
    %74 = vmatprep.subr.mxu0 0.0
    %75 = vmatpush1.msra.mxu0 0.0
    %76 = vmatprep.subr.mxu0 0.0
    %77 = vmatpush1.msra.mxu0 0.0
    %78 = vmatprep.subr.mxu0 0.0
    %79 = vmatpush1.msra.mxu0 0.0
    %80 = vmatprep.subr.mxu0 0.0
    %81 = vmatpush1.msra.mxu0 0.0
    %82 = vmatprep.subr.mxu0 0.0
    %83 = vmatpush1.msra.mxu0 0.0
    %84 = vmatprep.subr.mxu0 0.0
    %85 = vmatpush1.msra.mxu0 0.0
    %86 = vmatprep.subr.mxu0 0.0
    %87 = vmatpush1.msra.mxu0 0.0
    %88 = vmatprep.subr.mxu0 0.0
    %89 = vmatpush1.msra.mxu0 0.0
    %90 = vmatprep.subr.mxu0 0.0
    %91 = vmatpush1.msra.mxu0 0.0
    %92 = vmatprep.subr.mxu0 0.0
    %93 = vmatpush1.msra.mxu0 0.0
    %94 = vmatprep.subr.mxu0 0.0
    %95 = vmatpush1.msra.mxu0 0.0
    %96 = vmatprep.subr.mxu0 0.0
    %97 = vmatpush1.msra.mxu0 0.0
    %98 = vmatprep.subr.mxu0 0.0
    %99 = vmatpush1.msra.mxu0 0.0
    %100 = vmatprep.subr.mxu0 0.0
    %101 = vmatpush1.msra.mxu0 0.0
    %102 = vmatprep.subr.mxu0 0.0
    %103 = vmatpush1.msra.mxu0 0.0
    %104 = vmatprep.subr.mxu0 0.0
    %105 = vmatpush1.msra.mxu0 0.0
    %106 = vmatprep.subr.mxu0 0.0
    %107 = vmatpush1.msra.mxu0 0.0
    %108 = vmatprep.subr.mxu0 0.0
    %109 = vmatpush1.msra.mxu0 0.0
    %110 = vmatprep.subr.mxu0 0.0
    %111 = vmatpush1.msra.mxu0 0.0
    %112 = vmatprep.subr.mxu0 0.0
    %113 = vmatpush1.msra.mxu0 0.0
    %114 = vmatprep.subr.mxu0 0.0
    %115 = vmatpush1.msra.mxu0 0.0
    %116 = vmatprep.subr.mxu0 0.0
    %117 = vmatpush1.msra.mxu0 0.0
    %118 = vmatprep.subr.mxu0 0.0
    %119 = vmatpush1.msra.mxu0 0.0
    %120 = vmatprep.subr.mxu0 0.0
    %121 = vmatpush1.msra.mxu0 0.0
    %122 = vmatprep.subr.mxu0 0.0
    %123 = vmatpush1.msra.mxu0 0.0
    %124 = vmatprep.subr.mxu0 0.0
    %125 = vmatpush1.msra.mxu0 0.0
    %126 = vmatprep.mubr.f32.mxu0 0.0
    %127 = vmatmul.mubr.f32.gmra.mrb[0].mxu0 %v60
    %v128 = vpop.f32.mrb[0].mxu0
    %v129 = vadd.f32 %v56, %v128
    %v130 = vpop.f32.mrb[0].mxu0
    %131 = vdwg.mxu0
    %v132 = vsub.f32 0.0, %v129
    %v133 = vmul.f32 %v132, 1.442695
    %v134 = vpow.pop %v133
    %v135 = vadd.f32 %v134, 1.0
    %v136 = vrcp.pop %v135
    %v137 = vmul.f32 1.0, %v136
    %v138 = vmul.f32 %v129, %v137
    %v139 = vld [vmem:[#allocation2] sm:$0x3]
    %140 = vmatprep.subr.mxu0 0.0
    %141 = vmatpush1.msra.mxu0 %v35
    %142 = vmatprep.subr.mxu0 0.0
    %143 = vmatpush1.msra.mxu0 %v36
    %144 = vmatprep.subr.mxu0 0.0
    %145 = vmatpush1.msra.mxu0 %v37
    %146 = vmatprep.subr.mxu0 0.0
    %147 = vmatpush1.msra.mxu0 %v38
    %148 = vmatprep.subr.mxu0 0.0
    %149 = vmatpush1.msra.mxu0 %v39
    %150 = vmatprep.subr.mxu0 0.0
    %151 = vmatpush1.msra.mxu0 %v40
    %152 = vmatprep.subr.mxu0 0.0
    %153 = vmatpush1.msra.mxu0 %v41
    %154 = vmatprep.subr.mxu0 0.0
    %155 = vmatpush1.msra.mxu0 %v42
    %156 = vmatprep.subr.mxu0 0.0
    %157 = vmatpush1.msra.mxu0 %v43
    %158 = vmatprep.subr.mxu0 0.0
    %159 = vmatpush1.msra.mxu0 %v44
    %160 = vmatprep.subr.mxu0 0.0
    %161 = vmatpush1.msra.mxu0 %v45
    %162 = vmatprep.subr.mxu0 0.0
    %163 = vmatpush1.msra.mxu0 %v46
    %164 = vmatprep.subr.mxu0 0.0
    %165 = vmatpush1.msra.mxu0 %v47
    %166 = vmatprep.subr.mxu0 0.0
    %167 = vmatpush1.msra.mxu0 %v48
    %168 = vmatprep.subr.mxu0 0.0
    %169 = vmatpush1.msra.mxu0 %v49
    %170 = vmatprep.subr.mxu0 0.0
    %171 = vmatpush1.msra.mxu0 %v50
    %172 = vmatprep.subr.mxu0 0.0
    %173 = vmatpush1.msra.mxu0 0.0
    %174 = vmatprep.subr.mxu0 0.0
    %175 = vmatpush1.msra.mxu0 0.0
    %176 = vmatprep.subr.mxu0 0.0
    %177 = vmatpush1.msra.mxu0 0.0
    %178 = vmatprep.subr.mxu0 0.0
    %179 = vmatpush1.msra.mxu0 0.0
    %180 = vmatprep.subr.mxu0 0.0
    %181 = vmatpush1.msra.mxu0 0.0
    %182 = vmatprep.subr.mxu0 0.0
    %183 = vmatpush1.msra.mxu0 0.0
    %184 = vmatprep.subr.mxu0 0.0
    %185 = vmatpush1.msra.mxu0 0.0
    %186 = vmatprep.subr.mxu0 0.0
    %187 = vmatpush1.msra.mxu0 0.0
    %188 = vmatprep.subr.mxu0 0.0
    %189 = vmatpush1.msra.mxu0 0.0
    %190 = vmatprep.subr.mxu0 0.0
    %191 = vmatpush1.msra.mxu0 0.0
    %192 = vmatprep.subr.mxu0 0.0
    %193 = vmatpush1.msra.mxu0 0.0
    %194 = vmatprep.subr.mxu0 0.0
    %195 = vmatpush1.msra.mxu0 0.0
    %196 = vmatprep.subr.mxu0 0.0
    %197 = vmatpush1.msra.mxu0 0.0
    %198 = vmatprep.subr.mxu0 0.0
    %199 = vmatpush1.msra.mxu0 0.0
    %200 = vmatprep.subr.mxu0 0.0
    %201 = vmatpush1.msra.mxu0 0.0
    %202 = vmatprep.subr.mxu0 0.0
    %203 = vmatpush1.msra.mxu0 0.0
    %204 = vmatprep.mubr.f32.mxu0 0.0
    %205 = vmatmul.mubr.f32.gmra.mrb[0].mxu0 %v138
    %v206 = vpop.f32.mrb[0].mxu0
    %v207 = vadd.f32 0.0, %v206
    %v208 = vpop.f32.mrb[0].mxu0
    %209 = vdwg.mxu0
    %v210 = vadd.f32 %v139, %v207
    %vm211 = vcmask 517120
    %212 = vst.msk [vmem:[#allocation2] sm:$0x3] %vm211, %v210
    // Predicated region
    $region26: #{tpu_custom_call.1} parent=1 // pred_check
      %p213 = pneg %p24
    $region27: #{tpu_custom_call.1} parent=1 // pred_check_branch
      %215 = sbr.rel (%p213) target = $region29
    $region28: #{tpu_custom_call.1} parent=1 // pred_region
      %v216 = vld [vmem:[#allocation2] sm:$0x3]
      %v217 = vld [vmem:[%s4] sm:$0x1]
      %v219 = vlaneseq
      %v220 = vshrl.u32 %v219, 7
      %v221 = vsub.s32 0, %v220
      %v222 = vrot.slane %v217, %v221
      %v224 = vadd.f32 %v216, %v222
      %v225 = vadd.f32 %v224, 1.0
      %227 = vrot.lane.b32.xlu0 %v225, 32
      %v228 = vpop.permute.xlu0 %227
      %230 = vrot.lane.b32.xlu0 %v225, 64
      %v231 = vpop.permute.xlu0 %230
      %233 = vrot.lane.b32.xlu0 %v225, 96
      %v234 = vpop.permute.xlu0 %233
      %v236 = vsel %vm58, %v225, %v228
      %vm237 = vcmask 523264
      %v238 = vsel %vm237, %v236, %v231
      %vm239 = vcmask 785408
      %v240 = vsel %vm239, %v238, %v234
      %242 = vrot.lane.b32.xlu0 %v224, 96
      %v243 = vpop.permute.xlu0 %242
      %245 = vrot.lane.b32.xlu0 %v224, 32
      %v246 = vpop.permute.xlu0 %245
      %248 = vrot.lane.b32.xlu0 %v224, 64
      %v249 = vpop.permute.xlu0 %248
      %v251 = vsel %vm58, %v243, %v224
      %v252 = vsel %vm237, %v251, %v246
      %v253 = vsel %vm239, %v252, %v249
      %254 = vst [vmem:[#allocation3] sm:$0x3] %v240
      %255 = vst [vmem:[#allocation5] sm:$0x3] %v253
    $region29: #{tpu_custom_call.1} parent=1 // pred_fallthru
      _
    // Predicated region
    $region30: #{tpu_custom_call.1} parent=1 // pred_check
      _
    $region31: #{tpu_custom_call.1} parent=1 // pred_check_branch
      %257 = sbr.rel (0) target = $region33
    $region32: #{tpu_custom_call.1} parent=1 // pred_region
      %s259 = ssub.s32 32, 32
      %260 = vsyncadd [#allocation4], %s259
      %s262 = sshll.u32 [#allocation3], 4
      %s263 = int_to_ptr.vmem [resolvable:$true] %s262
      %265 = dma.vmem_to_hbm [thread:$0]  %s263, 32, %s5, [#allocation4]
    $region33: #{tpu_custom_call.1} parent=1 // pred_fallthru
      _
    // Predicated region
    $region34: #{tpu_custom_call.1} parent=1 // pred_check
      _
    $region35: #{tpu_custom_call.1} parent=1 // pred_check_branch
      %267 = sbr.rel (0) target = $region37
    $region36: #{tpu_custom_call.1} parent=1 // pred_region
      %s269 = ssub.s32 32, 32
      %270 = vsyncadd [#allocation6], %s269
      %s272 = sshll.u32 [#allocation5], 4
      %s273 = int_to_ptr.vmem [resolvable:$true] %s272
      %275 = dma.vmem_to_hbm [thread:$0]  %s273, 32, %s6, [#allocation6]
    $region37: #{tpu_custom_call.1} parent=1 // pred_fallthru
      _
    // Predicated region
    $region38: #{tpu_custom_call.1} parent=1 // pred_check
      _
    $region39: #{tpu_custom_call.1} parent=1 // pred_check_branch
      %277 = sbr.rel (0) target = $region41
    $region40: #{tpu_custom_call.1} parent=1 // pred_region
      %278 = dma.done [#allocation4], 32
    $region41: #{tpu_custom_call.1} parent=1 // pred_fallthru
      _
    // Predicated region
    $region42: #{tpu_custom_call.1} parent=1 // pred_check
      _
    $region43: #{tpu_custom_call.1} parent=1 // pred_check_branch
      %280 = sbr.rel (0) target = $region45
    $region44: #{tpu_custom_call.1} parent=1 // pred_region
      %281 = dma.done [#allocation6], 32
    $region45: #{tpu_custom_call.1} parent=1 // pred_fallthru
      _
    %282 = vsyncpa [#allocation4], 1
    %283 = vsyncpa [#allocation6], 1

</llo_original>
